<compile_context>
chip_gen: v6e
topology: v6e:2x2x1
jax: 0.10.0
libtpu: 0.0.40
codegen_flags: <defaults>
</compile_context>

<pallas_src>
import functools

import jax
import jax.numpy as jnp
from jax import lax
from jax.experimental import pallas as pl
from jax.experimental.pallas import tpu as pltpu


def _round_up(x, a):
    return ((x + a - 1) // a) * a


def _round_down(x, a):
    return (x // a) * a


def _cdiv(a, b):
    return (a + b - 1) // b


def _vmem_budget_bytes():
    """75% of physical VMEM (48 MiB v7x, 96 MiB v5e/v6e); conservative fallback."""
    phys = 64 * 1024 * 1024  # v7x has the smallest physical VMEM
    try:
        info = pltpu.get_tpu_info()
        phys = int(getattr(info, "vmem_capacity_bytes", phys))
    except Exception:
        pass
    return int(phys * 3 // 4)


def _plan_tiles(n, m, d, bytes_in, vmem_budget):
    """Pick (tm, tn) from the VMEM budget.

    Returns (tm, tn, aligned, gr, gc, m_pad).  `aligned` means both tiles
    divide n (every tile sits in one quadrant -> constant sign, no padding).
    """
    d_pad = _round_up(max(d, 1), 128)

    # Column tile: lane-aligned, modest (MXU rhs); spend VMEM headroom on tm.
    tn = None
    tn_aligned = False
    for cand in (512, 256, 128):
        if n % cand == 0:
            tn, tn_aligned = cand, True
            break
    if tn is None:
        tn = max(128, min(512, _round_up(m, 128)))

    # Row tile: budget-derived.  Count: double-buffered col tile, double-
    # buffered row tile (per row), ~4 f32 (tm,tn) temporaries (per row), slack.
    slack = 2 * 1024 * 1024
    cols_bytes = 2 * tn * d_pad * bytes_in
    per_row = 2 * d_pad * bytes_in + 4 * 4 * tn
    tm_cap = (vmem_budget - cols_bytes - slack) // per_row
    tm_cap = max(8, _round_down(int(tm_cap), 8))
    tm_cap = min(tm_cap, 2048)                      # bound unroll / intermediates
    m_rows = _round_up(m, 8)
    tm_cap = min(tm_cap, m_rows)
    if m_rows >= 16:
        # Keep >= 2 row blocks so the "parallel" axis feeds both v7x TensorCores.
        tm_cap = min(tm_cap, max(8, _round_down(m_rows // 2, 8)))

    tm = None
    aligned = False
    if tn_aligned:
        t = _round_down(min(tm_cap, n), 8)
        while t >= 8:
            if n % t == 0:
                tm, aligned = t, True
                break
            t -= 8
    if tm is None:
        tm = tm_cap

    gr = _cdiv(m, tm)
    gc = _cdiv(m, tn)
    m_pad = m if aligned else max(gr * tm, gc * tn)
    return tm, tn, aligned, gr, gc, m_pad


def _mmd_tile_kernel(nib_ref,          # SMEM (kernel_num,) f32: -1/bandwidth_i
                     rows_ref,         # VMEM (tm, D): row block of `total`
                     cols_ref,         # VMEM (tn, D): col block of `total`
                     sqr_ref,          # VMEM (tm, 1) f32: ||x||^2 rows
                     sqc_ref,          # VMEM (1, tn) f32: ||x||^2 cols
                     *rest,            # [sr_ref (tm,1), sc_ref (1,tn)] + out_ref (8,128)
                     kernel_num, aligned, row_top_blocks, col_top_blocks):
    if aligned:
        (out_ref,) = rest
    else:
        sr_ref, sc_ref, out_ref = rest

    j = pl.program_id(1)

    # Output block revisited across the last ("arbitrary") j axis -> accumulator.
    @pl.when(j == 0)
    def _init():
        out_ref[...] = jnp.zeros_like(out_ref)

    # Gram tile on the MXU (bf16 in, f32 out), contracting the feature dim of
    # both operands directly (no explicit transpose / relayout).
    gram = lax.dot_general(rows_ref[...], cols_ref[...],
                           (((1,), (1,)), ((), ())),
                           preferred_element_type=jnp.float32)       # (tm, tn)

    # ||x||^2 + ||y||^2 - 2<x,y>; clamp tiny negative cancellation residue.
    l2 = jnp.maximum(sqr_ref[...] + sqc_ref[...] - 2.0 * gram, 0.0)

    # Multi-scale Gaussian kernel: per-scale divide hoisted to an SMEM scalar
    # multiply; exp runs on the EUP.  First scale initializes (no zero-fill).
    kern = jnp.exp(l2 * nib_ref[0])
    for s in range(1, kernel_num):
        kern = kern + jnp.exp(l2 * nib_ref[s])

    tm, tn = kern.shape

    # Fold (tm, tn) -> (8, tn) -> (8, 128) with vreg-aligned static slices and
    # elementwise adds (pure VPU, no per-step XLU reduce / scalar broadcast).
    if aligned:
        acc = kern[0:8, :]
        for r in range(1, tm // 8):
            acc = acc + kern[r * 8:(r + 1) * 8, :]
    else:
        acc = kern[0:8, :] * sr_ref[0:8, :]
        for r in range(1, tm // 8):
            acc = acc + kern[r * 8:(r + 1) * 8, :] * sr_ref[r * 8:(r + 1) * 8, :]
        acc = acc * sc_ref[...]

    slab = acc[:, 0:128]
    for c in range(1, tn // 128):
        slab = slab + acc[:, c * 128:(c + 1) * 128]

    if aligned:
        # Tile lies entirely inside one quadrant -> constant +/-1 scalar sign.
        i = pl.program_id(0)
        same = (i < row_top_blocks) == (j < col_top_blocks)
        sign = jnp.where(same, 1.0, -1.0).astype(jnp.float32)
        out_ref[...] += sign * slab
    else:
        out_ref[...] += slab


def mmd_loss_pallas(src_data, target, key, kernel_mul=2.0, kernel_num=5,
                    gram_dtype=jnp.bfloat16):
    """JAX/Pallas equivalent of MMD_loss.forward(target).

    src_data: (N_src, D) float32 source pool
    target:   (B, D) or (B, S, D) float32 (mean over axis 1 if 3-D)
    key:      PRNG key standing in for np.random.choice (with replacement)
    """
    if target.ndim > 2:
        target = jnp.mean(target, axis=1)
    target = target.astype(jnp.float32)
    n, d = target.shape
    m = 2 * n

    # Random source sampling (same with-replacement distribution as np.random.choice).
    indices = jax.random.randint(key, (n,), 0, src_data.shape[0])
    source = src_data[indices].astype(jnp.float32)
    total = jnp.concatenate([source, target], axis=0)                 # (m, d)

    # Center (distance preserving): stabilizes the closed-form bandwidth and
    # the norms-minus-dot l2 assembly, and shrinks bf16 Gram error.
    total = total - jnp.mean(total, axis=0, keepdims=True)

    # Row norms (f32) in both layouts -> no per-tile cross-lane transpose.
    sq = jnp.sum(total * total, axis=-1)                              # (m,)

    # Closed-form adaptive bandwidth from the unpadded data: one O(m*D) pass,
    # no (m,m) matrix:  sum_ij ||x_i-x_j||^2 = 2m*sum||x||^2 - 2||sum x||^2.
    col_sum = jnp.sum(total, axis=0)
    sum_l2 = 2.0 * m * jnp.sum(sq) - 2.0 * jnp.sum(col_sum * col_sum)
    bandwidth = sum_l2 / float(m * m - m)
    bandwidth = bandwidth / (kernel_mul ** (kernel_num // 2))
    # NOTE: bandwidth == 0 (all samples identical) divides by zero, exactly as
    # the PyTorch original does.
    scales = jnp.asarray([kernel_mul ** i for i in range(kernel_num)],
                         dtype=jnp.float32)
    neg_inv_bw = (-1.0 / (bandwidth * scales)).astype(jnp.float32)    # (kernel_num,)

    # Tile plan (VMEM-budget aware).
    bytes_in = jnp.dtype(gram_dtype).itemsize
    vmem_budget = _vmem_budget_bytes()
    tm, tn, aligned, gr, gc, m_pad = _plan_tiles(n, m, d, bytes_in, vmem_budget)

    # Input tiles in gram_dtype (bf16 by default: halves DMA bytes + tile VMEM).
    total_x = total.astype(gram_dtype)
    if m_pad > m:
        pad = m_pad - m
        total_x = jnp.pad(total_x, ((0, pad), (0, 0)))
        sq = jnp.pad(sq, (0, pad))
    sq_row = sq.reshape(m_pad, 1)
    sq_col = sq.reshape(1, m_pad)

    kernel = functools.partial(
        _mmd_tile_kernel,
        kernel_num=kernel_num,
        aligned=aligned,
        row_top_blocks=(n // tm) if aligned else 0,
        col_top_blocks=(n // tn) if aligned else 0,
    )

    in_specs = [
        pl.BlockSpec(memory_space=pltpu.MemorySpace.SMEM),    # neg_inv_bw
        pl.BlockSpec((tm, d), lambda i, j: (i, 0)),           # total rows
        pl.BlockSpec((tn, d), lambda i, j: (j, 0)),           # total cols
        pl.BlockSpec((tm, 1), lambda i, j: (i, 0)),           # sq rows
        pl.BlockSpec((1, tn), lambda i, j: (0, j)),           # sq cols
    ]
    args = [neg_inv_bw, total_x, total_x, sq_row, sq_col]

    if not aligned:
        # +/-1 quadrant sign, 0 for padded rows/cols (zeroes their contribution).
        idx = jnp.arange(m_pad)
        sgn = jnp.where(idx < n, 1.0,
                        jnp.where(idx < m, -1.0, 0.0)).astype(jnp.float32)
        in_specs += [pl.BlockSpec((tm, 1), lambda i, j: (i, 0)),   # sign rows
                     pl.BlockSpec((1, tn), lambda i, j: (0, j))]   # sign cols
        args += [sgn.reshape(m_pad, 1), sgn.reshape(1, m_pad)]

    partials = pl.pallas_call(
        kernel,
        out_shape=jax.ShapeDtypeStruct((gr, 8, 128), jnp.float32),
        grid=(gr, gc),
        in_specs=in_specs,
        out_specs=pl.BlockSpec((None, 8, 128), lambda i, j: (i, 0, 0)),
        compiler_params=pltpu.CompilerParams(
            dimension_semantics=("parallel", "arbitrary"),
            vmem_limit_bytes=int(vmem_budget),
        ),
    )(*args)

    # One cross-lane reduce for the whole problem, done in the wrapper.
    return jnp.sum(partials) / float(n * n)


def mmd_loss_ref(src_data, target, key, kernel_mul=2.0, kernel_num=5):
    """Pure-JAX reference (mirrors the PyTorch forward) for validation."""
    if target.ndim > 2:
        target = jnp.mean(target, axis=1)
    target = target.astype(jnp.float32)
    n = target.shape[0]
    indices = jax.random.randint(key, (n,), 0, src_data.shape[0])
    source = src_data[indices].astype(jnp.float32)

    total = jnp.concatenate([source, target], axis=0)
    m = total.shape[0]
    diff = total[None, :, :] - total[:, None, :]
    l2 = jnp.sum(diff * diff, axis=2)
    bandwidth = jnp.sum(l2) / (m * m - m)
    bandwidth = bandwidth / (kernel_mul ** (kernel_num // 2))
    kern = sum(jnp.exp(-l2 / (bandwidth * kernel_mul ** i))
               for i in range(kernel_num))
    XX = kern[:n, :n]
    YY = kern[n:, n:]
    XY = kern[:n, n:]
    YX = kern[n:, :n]
    return jnp.mean(XX + YY - XY - YX)


if __name__ == "__main__":
    # Case 1: small, module-consistent shapes (3-D target -> mean over seq).
    # Exercises the padded / sign-vector path (n=8 not a multiple of 128).
    k_src, k_tgt, k_idx = jax.random.split(jax.random.PRNGKey(0), 3)
    src_data = jax.random.normal(k_src, (32, 32), dtype=jnp.float32)
    target = jax.random.normal(k_tgt, (8, 16, 32), dtype=jnp.float32)

    loss = jax.block_until_ready(mmd_loss_pallas(src_data, target, k_idx))
    ref = jax.block_until_ready(mmd_loss_ref(src_data, target, k_idx))
    assert jnp.isfinite(loss), "loss is not finite"
    # bf16 Gram -> looser tolerance vs the f32 reference.
    assert jnp.allclose(loss, ref, rtol=3e-2, atol=5e-3), (loss, ref)

    # Case 2: 128-aligned shapes exercising the tiled grid + scalar-sign path.
    k_src2, k_tgt2, k_idx2 = jax.random.split(jax.random.PRNGKey(1), 3)
    src_data2 = jax.random.normal(k_src2, (300, 256), dtype=jnp.float32)
    target2 = jax.random.normal(k_tgt2, (128, 256), dtype=jnp.float32) * 0.9

    loss2 = jax.block_until_ready(mmd_loss_pallas(src_data2, target2, k_idx2))
    ref2 = jax.block_until_ready(mmd_loss_ref(src_data2, target2, k_idx2))
    assert jnp.isfinite(loss2), "loss2 is not finite"
    assert jnp.allclose(loss2, ref2, rtol=3e-2, atol=5e-3), (loss2, ref2)

    # Case 2 again with the f32 Gram path: tight-tolerance correctness check.
    loss2_f32 = jax.block_until_ready(
        mmd_loss_pallas(src_data2, target2, k_idx2, gram_dtype=jnp.float32))
    assert jnp.isfinite(loss2_f32), "loss2_f32 is not finite"
    assert jnp.allclose(loss2_f32, ref2, rtol=1e-3, atol=1e-4), (loss2_f32, ref2)

    print("KERNEL_OK")
</pallas_src>

<mosaic_0001>
module attributes {stable_mosaic.version = 11 : i64} {
  func.func @_mmd_tile_kernel(%arg0: i32, %arg1: i32, %arg2: memref<5xf32, #tpu.memory_space<smem>>, %arg3: memref<8x32xbf16, #tpu.memory_space<vmem>>, %arg4: memref<128x32xbf16, #tpu.memory_space<vmem>>, %arg5: memref<8x1xf32, #tpu.memory_space<vmem>>, %arg6: memref<1x128xf32, #tpu.memory_space<vmem>>, %arg7: memref<8x1xf32, #tpu.memory_space<vmem>>, %arg8: memref<1x128xf32, #tpu.memory_space<vmem>>, %arg9: memref<1x8x128xf32, #tpu.memory_space<vmem>>) attributes {dimension_semantics = [#tpu.dimension_semantics<parallel>, #tpu.dimension_semantics<arbitrary>], iteration_bounds = array<i64: 2, 1>, scalar_prefetch = 0 : i64, scratch_operands = 0 : i64, tpu.core_type = #tpu.core_type<tc>, window_params = [{transform_indices = @transform_0, window_bounds = array<i64: 5>}, {transform_indices = @transform_1, window_bounds = array<i64: 8, 32>}, {transform_indices = @transform_2, window_bounds = array<i64: 128, 32>}, {transform_indices = @transform_3, window_bounds = array<i64: 8, 1>}, {transform_indices = @transform_4, window_bounds = array<i64: 1, 128>}, {transform_indices = @transform_5, window_bounds = array<i64: 8, 1>}, {transform_indices = @transform_6, window_bounds = array<i64: 1, 128>}, {transform_indices = @transform_7, window_bounds = array<i64: 1, 8, 128>}]} {
    %c0_i32 = arith.constant 0 : i32
    %0 = arith.cmpi eq, %arg1, %c0_i32 : i32
    %1 = arith.extui %0 : i1 to i32
    %c0_i32_0 = arith.constant 0 : i32
    %2 = arith.cmpi ne, %1, %c0_i32_0 : i32
    scf.if %2 {
      %cst_21 = arith.constant 0.000000e+00 : f32
      %52 = vector.broadcast %cst_21 : f32 to vector<8x128xf32>
      %c0_22 = arith.constant 0 : index
      %c0_23 = arith.constant 0 : index
      %c0_24 = arith.constant 0 : index
      %53 = vector.load %arg9[%c0_22, %c0_23, %c0_24] : memref<1x8x128xf32, #tpu.memory_space<vmem>>, vector<1x8x128xf32>
      %54 = vector.shape_cast %53 : vector<1x8x128xf32> to vector<8x128xf32>
      %55 = vector.shape_cast %52 : vector<8x128xf32> to vector<1x8x128xf32>
      tpu.vector_store %arg9[%c0_22, %c0_23, %c0_24], %55 {strides = array<i32>} : memref<1x8x128xf32, #tpu.memory_space<vmem>>, vector<1x8x128xf32>,
    } else {
    }
    %c0 = arith.constant 0 : index
    %c0_1 = arith.constant 0 : index
    %3 = vector.load %arg3[%c0, %c0_1] : memref<8x32xbf16, #tpu.memory_space<vmem>>, vector<8x32xbf16>
    %c0_2 = arith.constant 0 : index
    %c0_3 = arith.constant 0 : index
    %4 = vector.load %arg4[%c0_2, %c0_3] : memref<128x32xbf16, #tpu.memory_space<vmem>>, vector<128x32xbf16>
    %cst = arith.constant dense<0.000000e+00> : vector<8x128xf32>
    %5 = tpu.matmul %3, %4, %cst {dimension_numbers = #tpu.dot_dimension_numbers<[1], [1], [0], [0], [0, 0, 1, 0], [], []>} : vector<8x32xbf16>, vector<128x32xbf16>, vector<8x128xf32> -> vector<8x128xf32>
    %c0_4 = arith.constant 0 : index
    %c0_5 = arith.constant 0 : index
    %6 = vector.load %arg5[%c0_4, %c0_5] : memref<8x1xf32, #tpu.memory_space<vmem>>, vector<8x1xf32>
    %c0_6 = arith.constant 0 : index
    %c0_7 = arith.constant 0 : index
    %7 = vector.load %arg6[%c0_6, %c0_7] : memref<1x128xf32, #tpu.memory_space<vmem>>, vector<1x128xf32>
    %8 = vector.broadcast %6 : vector<8x1xf32> to vector<8x128xf32>
    %9 = vector.broadcast %7 : vector<1x128xf32> to vector<8x128xf32>
    %10 = arith.addf %8, %9 : vector<8x128xf32>
    %cst_8 = arith.constant 2.000000e+00 : f32
    %11 = vector.broadcast %cst_8 : f32 to vector<8x128xf32>
    %12 = arith.mulf %11, %5 : vector<8x128xf32>
    %13 = arith.subf %10, %12 : vector<8x128xf32>
    %cst_9 = arith.constant 0.000000e+00 : f32
    %14 = vector.broadcast %cst_9 : f32 to vector<8x128xf32>
    %15 = arith.maximumf %13, %14 : vector<8x128xf32>
    %c0_10 = arith.constant 0 : index
    %16 = memref.load %arg2[%c0_10] : memref<5xf32, #tpu.memory_space<smem>>
    %17 = vector.broadcast %16 : f32 to vector<8x128xf32>
    %18 = arith.mulf %15, %17 : vector<8x128xf32>
    %19 = math.exp %18 : vector<8x128xf32>
    %c1 = arith.constant 1 : index
    %20 = memref.load %arg2[%c1] : memref<5xf32, #tpu.memory_space<smem>>
    %21 = vector.broadcast %20 : f32 to vector<8x128xf32>
    %22 = arith.mulf %15, %21 : vector<8x128xf32>
    %23 = math.exp %22 : vector<8x128xf32>
    %24 = arith.addf %19, %23 : vector<8x128xf32>
    %c2 = arith.constant 2 : index
    %25 = memref.load %arg2[%c2] : memref<5xf32, #tpu.memory_space<smem>>
    %26 = vector.broadcast %25 : f32 to vector<8x128xf32>
    %27 = arith.mulf %15, %26 : vector<8x128xf32>
    %28 = math.exp %27 : vector<8x128xf32>
    %29 = arith.addf %24, %28 : vector<8x128xf32>
    %c3 = arith.constant 3 : index
    %30 = memref.load %arg2[%c3] : memref<5xf32, #tpu.memory_space<smem>>
    %31 = vector.broadcast %30 : f32 to vector<8x128xf32>
    %32 = arith.mulf %15, %31 : vector<8x128xf32>
    %33 = math.exp %32 : vector<8x128xf32>
    %34 = arith.addf %29, %33 : vector<8x128xf32>
    %c4 = arith.constant 4 : index
    %35 = memref.load %arg2[%c4] : memref<5xf32, #tpu.memory_space<smem>>
    %36 = vector.broadcast %35 : f32 to vector<8x128xf32>
    %37 = arith.mulf %15, %36 : vector<8x128xf32>
    %38 = math.exp %37 : vector<8x128xf32>
    %39 = arith.addf %34, %38 : vector<8x128xf32>
    %c0_11 = arith.constant 0 : index
    %c0_12 = arith.constant 0 : index
    %40 = vector.load %arg7[%c0_11, %c0_12] : memref<8x1xf32, #tpu.memory_space<vmem>>, vector<8x1xf32>
    %41 = vector.broadcast %40 : vector<8x1xf32> to vector<8x128xf32>
    %42 = arith.mulf %39, %41 : vector<8x128xf32>
    %c0_13 = arith.constant 0 : index
    %c0_14 = arith.constant 0 : index
    %43 = vector.load %arg8[%c0_13, %c0_14] : memref<1x128xf32, #tpu.memory_space<vmem>>, vector<1x128xf32>
    %44 = vector.broadcast %43 : vector<1x128xf32> to vector<8x128xf32>
    %45 = arith.mulf %42, %44 : vector<8x128xf32>
    %c0_15 = arith.constant 0 : index
    %c0_16 = arith.constant 0 : index
    %c0_17 = arith.constant 0 : index
    %46 = vector.load %arg9[%c0_15, %c0_16, %c0_17] : memref<1x8x128xf32, #tpu.memory_space<vmem>>, vector<1x8x128xf32>
    %47 = vector.shape_cast %46 : vector<1x8x128xf32> to vector<8x128xf32>
    %48 = arith.addf %47, %45 : vector<8x128xf32>
    %c0_18 = arith.constant 0 : index
    %c0_19 = arith.constant 0 : index
    %c0_20 = arith.constant 0 : index
    %49 = vector.load %arg9[%c0_18, %c0_19, %c0_20] : memref<1x8x128xf32, #tpu.memory_space<vmem>>, vector<1x8x128xf32>
    %50 = vector.shape_cast %49 : vector<1x8x128xf32> to vector<8x128xf32>
    %51 = vector.shape_cast %48 : vector<8x128xf32> to vector<1x8x128xf32>
    tpu.vector_store %arg9[%c0_18, %c0_19, %c0_20], %51 {strides = array<i32>} : memref<1x8x128xf32, #tpu.memory_space<vmem>>, vector<1x8x128xf32>,
    return
  }
  func.func @transform_0(%arg0: i32, %arg1: i32) -> i32 {
    %c0_i32 = arith.constant 0 : i32
    %c0_i32_0 = arith.constant 0 : i32
    return %c0_i32 : i32
  }
  func.func @transform_1(%arg0: i32, %arg1: i32) -> (i32, i32) {
    %c0_i32 = arith.constant 0 : i32
    %c0_i32_0 = arith.constant 0 : i32
    return %arg0, %c0_i32 : i32, i32
  }
  func.func @transform_2(%arg0: i32, %arg1: i32) -> (i32, i32) {
    %c0_i32 = arith.constant 0 : i32
    %c0_i32_0 = arith.constant 0 : i32
    return %arg1, %c0_i32 : i32, i32
  }
  func.func @transform_3(%arg0: i32, %arg1: i32) -> (i32, i32) {
    %c0_i32 = arith.constant 0 : i32
    %c0_i32_0 = arith.constant 0 : i32
    return %arg0, %c0_i32 : i32, i32
  }
  func.func @transform_4(%arg0: i32, %arg1: i32) -> (i32, i32) {
    %c0_i32 = arith.constant 0 : i32
    %c0_i32_0 = arith.constant 0 : i32
    return %c0_i32, %arg1 : i32, i32
  }
  func.func @transform_5(%arg0: i32, %arg1: i32) -> (i32, i32) {
    %c0_i32 = arith.constant 0 : i32
    %c0_i32_0 = arith.constant 0 : i32
    return %arg0, %c0_i32 : i32, i32
  }
  func.func @transform_6(%arg0: i32, %arg1: i32) -> (i32, i32) {
    %c0_i32 = arith.constant 0 : i32
    %c0_i32_0 = arith.constant 0 : i32
    return %c0_i32, %arg1 : i32, i32
  }
  func.func @transform_7(%arg0: i32, %arg1: i32) -> (i32, i32, i32) {
    %c0_i32 = arith.constant 0 : i32
    %c0_i32_0 = arith.constant 0 : i32
    %c0_i32_1 = arith.constant 0 : i32
    return %arg0, %c0_i32, %c0_i32_0 : i32, i32, i32
  }
}

</mosaic_0001>

<llo_original>
// kernel: tpu_custom_call.1
$region0: #{tpu_custom_call.1}
  #allocation0 [shape = 'u32[]', space=smem, size = 0x4, offset = 0x4, fixed_abs, tag = 'smem constant byte address 0x4 - core index']
  #allocation1 [shape = 'u32[144,128]{1,0:T(1,128)}', space=vmem, size = 0x12000, scoped, tag = 'internal scratch']
  %s0 = inlined_call_operand.vmem [shape: f32[5], index: 0, kind: input, shape index: {}]
  %s1 = inlined_call_operand.vmem [shape: bf16[128,32], index: 1, kind: input, shape index: {}]
  %s2 = inlined_call_operand.vmem [shape: bf16[128,32], index: 2, kind: input, shape index: {}]
  %s3 = inlined_call_operand.vmem [shape: f32[128,1], index: 3, kind: input, shape index: {}]
  %s4 = inlined_call_operand.vmem [shape: f32[1,128], index: 4, kind: input, shape index: {}]
  %s5 = inlined_call_operand.vmem [shape: f32[128,1], index: 5, kind: input, shape index: {}]
  %s6 = inlined_call_operand.vmem [shape: f32[1,128], index: 6, kind: input, shape index: {}]
  %s7 = inlined_call_operand.hbm [shape: f32[2,8,128], index: 7, kind: output, shape index: {}]
  %s8 = sld [smem:[#allocation0]]
  $region69: #{tpu_custom_call.1} parent=0
    _
  %s10 = ssub.s32 1, %s8
  %s11 = scalar_select 0, %s10, %s8
  $region1: #{tpu_custom_call.1} parent=0
    #allocation2 [shape = 'u8[512]{0}', space=smem, size = 0x200, scoped, tag = 'input window, operand 0, single buffered']
    #allocation3 [shape = 's32[2]{0}', space=sflag, size = 0x8, scoped, tag = 'scoped memory for tpu_custom_call.1']
    #allocation4 [shape = 's32[2]{0}', space=sflag, size = 0x8, scoped, tag = 'scoped memory for tpu_custom_call.1']
    #allocation5 [shape = 'u8[8192]{0}', space=vmem, size = 0x2000, scoped, tag = 'output window, operand 0']
    %12 = vsyncpa [#allocation4], 0
    %13 = vsyncpa [#allocation3], 0
    %s14 = scalar_lea.sflag [#allocation3], 1
    %15 = vsyncpa %s14, 0
    loop: start=0, step=1, limit=4
    $region2: #{tpu_custom_call.1} parent=1 // loop_pre_header
      _
    $region3: #{tpu_custom_call.1} parent=1 // loop_header
      %s17 = sphi 0, %s21
      %p18 = scmp.ge.s32.totalorder %s17, 4
      %s24 = sphi 0, %s36
      %s25 = sphi 0, %s32
      %s26 = sphi 0, %s24
      %s27 = sphi 0, %s25
      %s28 = sphi 0, %s26
      %s29 = sphi 0, %s27
      %s37 = sphi 0, %s37
      %s39 = sphi 0, %s37
      %s40 = sphi 0, %s39
      %s54 = sphi 0, %s40
      %s60 = sphi 0, %s62
      %s63 = sphi 0, %s60
      %s64 = sphi 0, %s63
      %s80 = sphi 0, %s64
      %s86 = sphi 0, %s88
      %s89 = sphi 0, %s86
      %s90 = sphi 0, %s89
      %s106 = sphi 0, %s90
      %s112 = sphi 0, %s114
      %s115 = sphi 0, %s112
      %s116 = sphi 0, %s115
      %s132 = sphi 0, %s116
      %s138 = sphi 0, %s140
      %s141 = sphi 0, %s138
      %s142 = sphi 0, %s141
      %s158 = sphi 0, %s142
      %s164 = sphi 0, %s166
      %s167 = sphi 0, %s164
      %s168 = sphi 0, %s167
      %s184 = sphi 0, %s168
      %s190 = sphi 0, %s192
      %s193 = sphi 0, %s190
      %s194 = sphi 0, %s193
      %s210 = sphi 0, %s194
      %s216 = sphi 0, %s218
      %s219 = sphi 0, %s216
      %s220 = sphi 0, %s219
      %s236 = sphi 0, %s220
    $region4: #{tpu_custom_call.1} parent=1 // loop_header_branch
      %20 = sbr.rel (%p18) target = $region8
    $region5: #{tpu_custom_call.1} parent=1 // loop_body
      %s22 = ssub.s32 %s17, 1
      %s23 = ssub.s32 %s17, 2
      %s30 = sadd.s32 1, %s25
      %p31 = scmp.ge.s32.totalorder %s30, 1
      %s32 = scalar_select %p31, 0, %s30
      %s33 = sadd.s32 1, %s24
      %s34 = scalar_select %p31, %s33, %s24
      %p35 = scmp.ge.s32.totalorder %s34, 2
      %s36 = scalar_select %p35, 0, %s34
      %s38 = sadd.s32 %s37, 1
      %p41 = scmp.eq.s32.totalorder %s17, 1
      %p42 = scmp.ne.s32.totalorder %s37, %s39
      %p43 = scmp.eq.s32.totalorder %s17, 0
      %p44 = por %p42, %p43
      %p45 = scmp.ne.s32.totalorder %s37, %s39
      %p46 = scmp.eq.s32.totalorder %s22, 1
      %p47 = por %p45, %p46
      %p48 = scmp.ne.s32.totalorder %s39, %s40
      %p49 = scmp.eq.s32.totalorder %s22, 0
      %p50 = por %p48, %p49
      %p51 = scmp.ne.s32.totalorder %s39, %s40
      %p52 = scmp.eq.s32.totalorder %s23, 1
      %p53 = por %p51, %p52
      %p55 = scmp.ne.s32.totalorder %s40, %s54
      %p56 = scmp.eq.s32.totalorder %s23, 0
      %p57 = por %p55, %p56
      %s58 = ssub.s32 %s24, %s36
      %p59 = scmp.eq.s32.totalorder %s58, 0
      %s61 = sadd.s32 %s60, 1
      %s62 = scalar_select %p59, %s60, %s61
      %p65 = pneg %p59
      %p66 = scmp.eq.s32.totalorder %s17, 1
      %p67 = por %p65, %p66
      %p68 = scmp.ne.s32.totalorder %s60, %s63
      %p69 = scmp.eq.s32.totalorder %s17, 0
      %p70 = por %p68, %p69
      %p71 = scmp.ne.s32.totalorder %s60, %s63
      %p72 = scmp.eq.s32.totalorder %s22, 1
      %p73 = por %p71, %p72
      %p74 = scmp.ne.s32.totalorder %s63, %s64
      %p75 = scmp.eq.s32.totalorder %s22, 0
      %p76 = por %p74, %p75
      %p77 = scmp.ne.s32.totalorder %s63, %s64
      %p78 = scmp.eq.s32.totalorder %s23, 1
      %p79 = por %p77, %p78
      %p81 = scmp.ne.s32.totalorder %s64, %s80
      %p82 = scmp.eq.s32.totalorder %s23, 0
      %p83 = por %p81, %p82
      %s84 = ssub.s32 %s25, %s32
      %p85 = scmp.eq.s32.totalorder %s84, 0
      %s87 = sadd.s32 %s86, 1
      %s88 = scalar_select %p85, %s86, %s87
      %p91 = pneg %p85
      %p92 = scmp.eq.s32.totalorder %s17, 1
      %p93 = por %p91, %p92
      %p94 = scmp.ne.s32.totalorder %s86, %s89
      %p95 = scmp.eq.s32.totalorder %s17, 0
      %p96 = por %p94, %p95
      %p97 = scmp.ne.s32.totalorder %s86, %s89
      %p98 = scmp.eq.s32.totalorder %s22, 1
      %p99 = por %p97, %p98
      %p100 = scmp.ne.s32.totalorder %s89, %s90
      %p101 = scmp.eq.s32.totalorder %s22, 0
      %p102 = por %p100, %p101
      %p103 = scmp.ne.s32.totalorder %s89, %s90
      %p104 = scmp.eq.s32.totalorder %s23, 1
      %p105 = por %p103, %p104
      %p107 = scmp.ne.s32.totalorder %s90, %s106
      %p108 = scmp.eq.s32.totalorder %s23, 0
      %p109 = por %p107, %p108
      %s110 = ssub.s32 %s24, %s36
      %p111 = scmp.eq.s32.totalorder %s110, 0
      %s113 = sadd.s32 %s112, 1
      %s114 = scalar_select %p111, %s112, %s113
      %p117 = pneg %p111
      %p118 = scmp.eq.s32.totalorder %s17, 1
      %p119 = por %p117, %p118
      %p120 = scmp.ne.s32.totalorder %s112, %s115
      %p121 = scmp.eq.s32.totalorder %s17, 0
      %p122 = por %p120, %p121
      %p123 = scmp.ne.s32.totalorder %s112, %s115
      %p124 = scmp.eq.s32.totalorder %s22, 1
      %p125 = por %p123, %p124
      %p126 = scmp.ne.s32.totalorder %s115, %s116
      %p127 = scmp.eq.s32.totalorder %s22, 0
      %p128 = por %p126, %p127
      %p129 = scmp.ne.s32.totalorder %s115, %s116
      %p130 = scmp.eq.s32.totalorder %s23, 1
      %p131 = por %p129, %p130
      %p133 = scmp.ne.s32.totalorder %s116, %s132
      %p134 = scmp.eq.s32.totalorder %s23, 0
      %p135 = por %p133, %p134
      %s136 = ssub.s32 %s25, %s32
      %p137 = scmp.eq.s32.totalorder %s136, 0
      %s139 = sadd.s32 %s138, 1
      %s140 = scalar_select %p137, %s138, %s139
      %p143 = pneg %p137
      %p144 = scmp.eq.s32.totalorder %s17, 1
      %p145 = por %p143, %p144
      %p146 = scmp.ne.s32.totalorder %s138, %s141
      %p147 = scmp.eq.s32.totalorder %s17, 0
      %p148 = por %p146, %p147
      %p149 = scmp.ne.s32.totalorder %s138, %s141
      %p150 = scmp.eq.s32.totalorder %s22, 1
      %p151 = por %p149, %p150
      %p152 = scmp.ne.s32.totalorder %s141, %s142
      %p153 = scmp.eq.s32.totalorder %s22, 0
      %p154 = por %p152, %p153
      %p155 = scmp.ne.s32.totalorder %s141, %s142
      %p156 = scmp.eq.s32.totalorder %s23, 1
      %p157 = por %p155, %p156
      %p159 = scmp.ne.s32.totalorder %s142, %s158
      %p160 = scmp.eq.s32.totalorder %s23, 0
      %p161 = por %p159, %p160
      %s162 = ssub.s32 %s24, %s36
      %p163 = scmp.eq.s32.totalorder %s162, 0
      %s165 = sadd.s32 %s164, 1
      %s166 = scalar_select %p163, %s164, %s165
      %p169 = pneg %p163
      %p170 = scmp.eq.s32.totalorder %s17, 1
      %p171 = por %p169, %p170
      %p172 = scmp.ne.s32.totalorder %s164, %s167
      %p173 = scmp.eq.s32.totalorder %s17, 0
      %p174 = por %p172, %p173
      %p175 = scmp.ne.s32.totalorder %s164, %s167
      %p176 = scmp.eq.s32.totalorder %s22, 1
      %p177 = por %p175, %p176
      %p178 = scmp.ne.s32.totalorder %s167, %s168
      %p179 = scmp.eq.s32.totalorder %s22, 0
      %p180 = por %p178, %p179
      %p181 = scmp.ne.s32.totalorder %s167, %s168
      %p182 = scmp.eq.s32.totalorder %s23, 1
      %p183 = por %p181, %p182
      %p185 = scmp.ne.s32.totalorder %s168, %s184
      %p186 = scmp.eq.s32.totalorder %s23, 0
      %p187 = por %p185, %p186
      %s188 = ssub.s32 %s25, %s32
      %p189 = scmp.eq.s32.totalorder %s188, 0
      %s191 = sadd.s32 %s190, 1
      %s192 = scalar_select %p189, %s190, %s191
      %p195 = pneg %p189
      %p196 = scmp.eq.s32.totalorder %s17, 1
      %p197 = por %p195, %p196
      %p198 = scmp.ne.s32.totalorder %s190, %s193
      %p199 = scmp.eq.s32.totalorder %s17, 0
      %p200 = por %p198, %p199
      %p201 = scmp.ne.s32.totalorder %s190, %s193
      %p202 = scmp.eq.s32.totalorder %s22, 1
      %p203 = por %p201, %p202
      %p204 = scmp.ne.s32.totalorder %s193, %s194
      %p205 = scmp.eq.s32.totalorder %s22, 0
      %p206 = por %p204, %p205
      %p207 = scmp.ne.s32.totalorder %s193, %s194
      %p208 = scmp.eq.s32.totalorder %s23, 1
      %p209 = por %p207, %p208
      %p211 = scmp.ne.s32.totalorder %s194, %s210
      %p212 = scmp.eq.s32.totalorder %s23, 0
      %p213 = por %p211, %p212
      %s214 = ssub.s32 %s24, %s36
      %p215 = scmp.eq.s32.totalorder %s214, 0
      %s217 = sadd.s32 %s216, 1
      %s218 = scalar_select %p215, %s216, %s217
      %p221 = pneg %p215
      %p222 = scmp.eq.s32.totalorder %s17, 1
      %p223 = por %p221, %p222
      %p224 = scmp.ne.s32.totalorder %s216, %s219
      %p225 = scmp.eq.s32.totalorder %s17, 0
      %p226 = por %p224, %p225
      %p227 = scmp.ne.s32.totalorder %s216, %s219
      %p228 = scmp.eq.s32.totalorder %s22, 1
      %p229 = por %p227, %p228
      %p230 = scmp.ne.s32.totalorder %s219, %s220
      %p231 = scmp.eq.s32.totalorder %s22, 0
      %p232 = por %p230, %p231
      %p233 = scmp.ne.s32.totalorder %s219, %s220
      %p234 = scmp.eq.s32.totalorder %s23, 1
      %p235 = por %p233, %p234
      %p237 = scmp.ne.s32.totalorder %s220, %s236
      %p238 = scmp.eq.s32.totalorder %s23, 0
      %p239 = por %p237, %p238
      %p240 = scmp.le.s32.totalorder 1, %s17
      %p241 = scmp.lt.s32.totalorder %s17, 3
      %p242 = pnand %p240, %p241
      %p243 = pneg %p242
      // Predicated region
      $region9: #{tpu_custom_call.1} parent=5 // pred_check
        _
      $region10: #{tpu_custom_call.1} parent=5 // pred_check_branch
        %245 = sbr.rel (%p242) target = $region12
      $region11: #{tpu_custom_call.1} parent=5 // pred_region
        %s246 = ssub.s32 %s17, 1
        // Predicated region
        $region13: #{tpu_custom_call.1} parent=11 // pred_check
          %p247 = pneg %p50
        $region14: #{tpu_custom_call.1} parent=11 // pred_check_branch
          %249 = sbr.rel (%p247) target = $region16
        $region15: #{tpu_custom_call.1} parent=11 // pred_region
          %s251 = ssub.s32 16, 16
          %252 = vsyncadd [#allocation4], %s251
          %s254 = sshll.u32 %s0, 4
          %s255 = int_to_ptr.vmem [resolvable:$true] %s254
          %257 = dma.vmem_to_smem %s255, 16, [#allocation2], [#allocation4]
        $region16: #{tpu_custom_call.1} parent=11 // pred_fallthru
          _
        // Predicated region
        $region17: #{tpu_custom_call.1} parent=11 // pred_check
          %p258 = pneg %p102
        $region18: #{tpu_custom_call.1} parent=11 // pred_check_branch
          %260 = sbr.rel (%p258) target = $region20
        $region19: #{tpu_custom_call.1} parent=11 // pred_region
          %s261 = smul.u32 16, %s27
          %p262 = scmp.lt.s32.totalorder %s261, 15
          %s263 = scalar_select %p262, %s261, 15
          %s264 = smul.addr %s263, 4
          %s265 = scalar_lea.vmem %s2, %s264
          %s266 = smul.u32 16, %s27
        $region20: #{tpu_custom_call.1} parent=11 // pred_fallthru
          _
        // Predicated region
        $region21: #{tpu_custom_call.1} parent=11 // pred_check
          %p267 = pneg %p154
        $region22: #{tpu_custom_call.1} parent=11 // pred_check_branch
          %269 = sbr.rel (%p267) target = $region24
        $region23: #{tpu_custom_call.1} parent=11 // pred_region
          %p270 = scmp.lt.s32.totalorder %s27, 0
          %s271 = scalar_select %p270, %s27, 0
          %s272 = scalar_lea.vmem %s4, %s271
        $region24: #{tpu_custom_call.1} parent=11 // pred_fallthru
          _
        // Predicated region
        $region25: #{tpu_custom_call.1} parent=11 // pred_check
          %p273 = pneg %p206
        $region26: #{tpu_custom_call.1} parent=11 // pred_check_branch
          %275 = sbr.rel (%p273) target = $region28
        $region27: #{tpu_custom_call.1} parent=11 // pred_region
          %p276 = scmp.lt.s32.totalorder %s27, 0
          %s277 = scalar_select %p276, %s27, 0
          %s278 = scalar_lea.vmem %s6, %s277
        $region28: #{tpu_custom_call.1} parent=11 // pred_fallthru
          _
      $region12: #{tpu_custom_call.1} parent=5 // pred_fallthru
        _
      %p279 = scmp.lt.s32.totalorder %s17, 2
      // Predicated region
      $region29: #{tpu_custom_call.1} parent=5 // pred_check
        %p280 = pneg %p279
      $region30: #{tpu_custom_call.1} parent=5 // pred_check_branch
        %282 = sbr.rel (%p280) target = $region32
      $region31: #{tpu_custom_call.1} parent=5 // pred_region
        // Predicated region
        $region33: #{tpu_custom_call.1} parent=31 // pred_check
          %p283 = pneg %p70
        $region34: #{tpu_custom_call.1} parent=31 // pred_check_branch
          %285 = sbr.rel (%p283) target = $region36
        $region35: #{tpu_custom_call.1} parent=31 // pred_region
          %p286 = scmp.lt.s32.totalorder %s24, 15
          %s287 = scalar_select %p286, %s24, 15
          %s288 = smul.addr %s287, 4
          %s289 = scalar_lea.vmem %s1, %s288
        $region36: #{tpu_custom_call.1} parent=31 // pred_fallthru
          _
        // Predicated region
        $region37: #{tpu_custom_call.1} parent=31 // pred_check
          %p290 = pneg %p122
        $region38: #{tpu_custom_call.1} parent=31 // pred_check_branch
          %292 = sbr.rel (%p290) target = $region40
        $region39: #{tpu_custom_call.1} parent=31 // pred_region
          %p293 = scmp.lt.s32.totalorder %s24, 15
          %s294 = scalar_select %p293, %s24, 15
          %s295 = smul.addr %s294, 8
          %s296 = scalar_lea.vmem %s3, %s295
        $region40: #{tpu_custom_call.1} parent=31 // pred_fallthru
          _
        // Predicated region
        $region41: #{tpu_custom_call.1} parent=31 // pred_check
          %p297 = pneg %p174
        $region42: #{tpu_custom_call.1} parent=31 // pred_check_branch
          %299 = sbr.rel (%p297) target = $region44
        $region43: #{tpu_custom_call.1} parent=31 // pred_region
          %p300 = scmp.lt.s32.totalorder %s24, 15
          %s301 = scalar_select %p300, %s24, 15
          %s302 = smul.addr %s301, 8
          %s303 = scalar_lea.vmem %s5, %s302
        $region44: #{tpu_custom_call.1} parent=31 // pred_fallthru
          _
      $region32: #{tpu_custom_call.1} parent=5 // pred_fallthru
        _
      %p304 = scmp.le.s32.totalorder 1, %s17
      %p305 = scmp.lt.s32.totalorder %s17, 3
      %p306 = pnand %p304, %p305
      %p307 = pneg %p306
      // Predicated region
      $region45: #{tpu_custom_call.1} parent=5 // pred_check
        _
      $region46: #{tpu_custom_call.1} parent=5 // pred_check_branch
        %309 = sbr.rel (%p306) target = $region48
      $region47: #{tpu_custom_call.1} parent=5 // pred_region
        %s310 = ssub.s32 %s17, 1
        // Predicated region
        $region49: #{tpu_custom_call.1} parent=47 // pred_check
          %p311 = pneg %p50
        $region50: #{tpu_custom_call.1} parent=47 // pred_check_branch
          %313 = sbr.rel (%p311) target = $region52
        $region51: #{tpu_custom_call.1} parent=47 // pred_region
          %314 = dma.done [#allocation4], 16
        $region52: #{tpu_custom_call.1} parent=47 // pred_fallthru
          _
        %315 = sfence
        %p316 = pneg %p50
        %p317 = pneg %p47
        %p318 = scmp.lt.s32.totalorder %s26, 15
        %s319 = scalar_select %p318, %s26, 15
        %s320 = smul.addr %s319, 4
        %s321 = scalar_lea.vmem %s1, %s320
        %p322 = pneg %p76
        %p323 = pneg %p73
        %s324 = smul.u32 16, %s27
        %p325 = scmp.lt.s32.totalorder %s324, 15
        %s326 = scalar_select %p325, %s324, 15
        %s327 = smul.addr %s326, 4
        %s328 = scalar_lea.vmem %s2, %s327
        %p329 = pneg %p102
        %p330 = pneg %p99
        %p331 = scmp.lt.s32.totalorder %s26, 15
        %s332 = scalar_select %p331, %s26, 15
        %s333 = smul.addr %s332, 8
        %s334 = scalar_lea.vmem %s3, %s333
        %p335 = pneg %p128
        %p336 = pneg %p125
        %p337 = scmp.lt.s32.totalorder %s27, 0
        %s338 = scalar_select %p337, %s27, 0
        %s339 = scalar_lea.vmem %s4, %s338
        %p340 = pneg %p154
        %p341 = pneg %p151
        %p342 = scmp.lt.s32.totalorder %s26, 15
        %s343 = scalar_select %p342, %s26, 15
        %s344 = smul.addr %s343, 8
        %s345 = scalar_lea.vmem %s5, %s344
        %p346 = pneg %p180
        %p347 = pneg %p177
        %p348 = scmp.lt.s32.totalorder %s27, 0
        %s349 = scalar_select %p348, %s27, 0
        %s350 = scalar_lea.vmem %s6, %s349
        %p351 = pneg %p206
        %p352 = pneg %p203
        %p353 = pneg %p232
        %p354 = pneg %p229
        %s355 = sand.u32 %s219, 1
        %s356 = scalar_lea.sflag [#allocation3], %s355
        %s357 = sand.u32 %s219, 1
        %s358 = smul.addr %s357, 8
        %s359 = scalar_lea.vmem [#allocation5], %s358
        %p360 = scmp.lt.s32.totalorder %s26, 15
        %s361 = scalar_select %p360, %s26, 15
        %s362 = smul.addr %s361, 4
        %s363 = scalar_lea.vmem %s1, %s362
        %s364 = smul.u32 16, %s27
        %p365 = scmp.lt.s32.totalorder %s364, 15
        %s366 = scalar_select %p365, %s364, 15
        %s367 = smul.addr %s366, 4
        %s368 = scalar_lea.vmem %s2, %s367
        %s369 = smul.u32 16, %s27
        %p370 = scmp.lt.s32.totalorder %s26, 15
        %s371 = scalar_select %p370, %s26, 15
        %s372 = smul.addr %s371, 8
        %s373 = scalar_lea.vmem %s3, %s372
        %p374 = scmp.lt.s32.totalorder %s27, 0
        %s375 = scalar_select %p374, %s27, 0
        %s376 = scalar_lea.vmem %s4, %s375
        %p377 = scmp.lt.s32.totalorder %s26, 15
        %s378 = scalar_select %p377, %s26, 15
        %s379 = smul.addr %s378, 8
        %s380 = scalar_lea.vmem %s5, %s379
        %p381 = scmp.lt.s32.totalorder %s27, 0
        %s382 = scalar_select %p381, %s27, 0
        %s383 = scalar_lea.vmem %s6, %s382
        %p385 = scmp.eq.s32.totalorder %s27, 0
        // Predicated region
        $region53: #{tpu_custom_call.1} parent=47 // pred_check
          %p386 = pneg %p385
        $region54: #{tpu_custom_call.1} parent=47 // pred_check_branch
          %388 = sbr.rel (%p386) target = $region56
        $region55: #{tpu_custom_call.1} parent=47 // pred_region
          %389 = vst [vmem:[%s359] sm:$0xff] 0.0
        $region56: #{tpu_custom_call.1} parent=47 // pred_fallthru
          _
        %v390 = vld [vmem:[%s363] sm:$0xf]
        %v391 = vld [vmem:[%s368] sm:$0xf]
        %v392 = vld [vmem:[%s368 + $0x4] sm:$0xf]
        %v393 = vld [vmem:[%s368 + $0x8] sm:$0xf]
        %v394 = vld [vmem:[%s368 + $0xc] sm:$0xf]
        %v395 = vld [vmem:[%s368 + $0x10] sm:$0xf]
        %v396 = vld [vmem:[%s368 + $0x14] sm:$0xf]
        %v397 = vld [vmem:[%s368 + $0x18] sm:$0xf]
        %v398 = vld [vmem:[%s368 + $0x1c] sm:$0xf]
        %v399 = vld [vmem:[%s368 + $0x20] sm:$0xf]
        %v400 = vld [vmem:[%s368 + $0x24] sm:$0xf]
        %v401 = vld [vmem:[%s368 + $0x28] sm:$0xf]
        %v402 = vld [vmem:[%s368 + $0x2c] sm:$0xf]
        %v403 = vld [vmem:[%s368 + $0x30] sm:$0xf]
        %v404 = vld [vmem:[%s368 + $0x34] sm:$0xf]
        %v405 = vld [vmem:[%s368 + $0x38] sm:$0xf]
        %v406 = vld [vmem:[%s368 + $0x3c] sm:$0xf]
        %v423 = vunpack.c.l.b16 %v391
        %v424 = vunpack.c.l.b16 %v392
        %v425 = vunpack.c.l.b16 %v393
        %v426 = vunpack.c.l.b16 %v394
        %v427 = vunpack.c.l.b16 %v395
        %v428 = vunpack.c.l.b16 %v396
        %v429 = vunpack.c.l.b16 %v397
        %v430 = vunpack.c.l.b16 %v398
        %v431 = vunpack.c.l.b16 %v399
        %v432 = vunpack.c.l.b16 %v400
        %v433 = vunpack.c.l.b16 %v401
        %v434 = vunpack.c.l.b16 %v402
        %v435 = vunpack.c.l.b16 %v403
        %v436 = vunpack.c.l.b16 %v404
        %v437 = vunpack.c.l.b16 %v405
        %v438 = vunpack.c.l.b16 %v406
        %v439 = vpack.c.b16 %v424, %v423
        %v440 = vpack.c.b16 %v426, %v425
        %v441 = vpack.c.b16 %v428, %v427
        %v442 = vpack.c.b16 %v430, %v429
        %v443 = vpack.c.b16 %v432, %v431
        %v444 = vpack.c.b16 %v434, %v433
        %v445 = vpack.c.b16 %v436, %v435
        %v446 = vpack.c.b16 %v438, %v437
        %vm447 = vcmask 261120
        %v449 = vsel %vm447, %v390, 0
        %v452 = vsel %vm447, %v439, 0
        %v455 = vsel %vm447, %v440, 0
        %v458 = vsel %vm447, %v441, 0
        %v461 = vsel %vm447, %v442, 0
        %v464 = vsel %vm447, %v443, 0
        %v467 = vsel %vm447, %v444, 0
        %v470 = vsel %vm447, %v445, 0
        %v473 = vsel %vm447, %v446, 0
        %475 = vmatprep.subr.bf16.mxu0 0
        %476 = vmatpush1.bf16.xpose.msra.mxu0 %v473
        %477 = vmatprep.subr.bf16.mxu0 0
        %478 = vmatpush1.bf16.xpose.msra.mxu0 %v470
        %479 = vmatprep.subr.bf16.mxu0 0
        %480 = vmatpush1.bf16.xpose.msra.mxu0 %v467
        %481 = vmatprep.subr.bf16.mxu0 0
        %482 = vmatpush1.bf16.xpose.msra.mxu0 %v464
        %483 = vmatprep.subr.bf16.mxu0 0
        %484 = vmatpush1.bf16.xpose.msra.mxu0 %v461
        %485 = vmatprep.subr.bf16.mxu0 0
        %486 = vmatpush1.bf16.xpose.msra.mxu0 %v458
        %487 = vmatprep.subr.bf16.mxu0 0
        %488 = vmatpush1.bf16.xpose.msra.mxu0 %v455
        %489 = vmatprep.subr.bf16.mxu0 0
        %490 = vmatpush1.bf16.xpose.msra.mxu0 %v452
        %491 = vmatprep.subr.bf16.mxu0 0
        %492 = vmatpush2.bf16.xpose.msra.mxu0 0
        %493 = vmatprep.subr.bf16.mxu0 0
        %494 = vmatpush2.bf16.xpose.msra.mxu0 0
        %495 = vmatprep.subr.bf16.mxu0 0
        %496 = vmatpush2.bf16.xpose.msra.mxu0 0
        %497 = vmatprep.subr.bf16.mxu0 0
        %498 = vmatpush2.bf16.xpose.msra.mxu0 0
        %499 = vmatprep.subr.bf16.mxu0 0
        %500 = vmatpush2.bf16.xpose.msra.mxu0 0
        %501 = vmatprep.subr.bf16.mxu0 0
        %502 = vmatpush2.bf16.xpose.msra.mxu0 0
        %503 = vmatprep.subr.bf16.mxu0 0
        %504 = vmatpush2.bf16.xpose.msra.mxu0 0
        %505 = vmatprep.subr.bf16.mxu0 0
        %506 = vmatpush2.bf16.xpose.msra.mxu0 0
        %507 = vmatprep.mubr.bf16.mxu0 0
        %508 = vmatmul.mubr.bf16.gmra.mxu0 %v449
        %v509 = vpop.f32.mrf.mxu0
        %v510 = vadd.f32 0.0, %v509
        %v511 = vpop.f32.mrf.mxu0
        %v512 = vpop.f32.mrf.mxu0
        %v513 = vpop.f32.mrf.mxu0
        %514 = vdwg.mxu0
        %v515 = vld [vmem:[%s373] sm:$0xff]
        %v516 = vld [vmem:[%s376] sm:$0x1]
        %518 = vset.pattern.permute.xlu0 0
        %519 = vperm.xlu0 %518, %v515
        %v520 = vpop.permute.xlu0 %519
        %v523 = vlaneseq
        %v524 = vshrl.u32 %v523, 7
        %v525 = vsub.s32 0, %v524
        %v526 = vrot.slane %v516, %v525
        %v528 = vadd.f32 %v520, %v526
        %v529 = vmul.f32 %v510, 2.0
        %v530 = vsub.f32 %v528, %v529
        %v531 = vmax.f32 %v530, 0.0
        %s532 = sld [smem:[#allocation2]]
        %v533 = vstv %s532
        %v534 = vmul.f32 %v531, %v533
        %v535 = vmul.f32 %v534, 1.442695
        %v536 = vpow.pop %v535
        %s537 = sld [smem:[#allocation2 + $0x1]]
        %v538 = vstv %s537
        %v539 = vmul.f32 %v531, %v538
        %v540 = vmul.f32 %v539, 1.442695
        %v541 = vpow.pop %v540
        %v542 = vadd.f32 %v536, %v541
        %s543 = sld [smem:[#allocation2 + $0x2]]
        %v544 = vstv %s543
        %v545 = vmul.f32 %v531, %v544
        %v546 = vmul.f32 %v545, 1.442695
        %v547 = vpow.pop %v546
        %v548 = vadd.f32 %v542, %v547
        %s549 = sld [smem:[#allocation2 + $0x3]]
        %v550 = vstv %s549
        %v551 = vmul.f32 %v531, %v550
        %v552 = vmul.f32 %v551, 1.442695
        %v553 = vpow.pop %v552
        %v554 = vadd.f32 %v548, %v553
        %s555 = sld [smem:[#allocation2 + $0x4]]
        %v556 = vstv %s555
        %v557 = vmul.f32 %v531, %v556
        %v558 = vmul.f32 %v557, 1.442695
        %v559 = vpow.pop %v558
        %v560 = vadd.f32 %v554, %v559
        %v561 = vld [vmem:[%s380] sm:$0xff]
        %563 = vset.pattern.permute.xlu0 0
        %564 = vperm.xlu0 %563, %v561
        %v565 = vpop.permute.xlu0 %564
        %v567 = vmul.f32 %v560, %v565
        %v568 = vld [vmem:[%s383] sm:$0x1]
        %v570 = vlaneseq
        %v571 = vshrl.u32 %v570, 7
        %v572 = vsub.s32 0, %v571
        %v573 = vrot.slane %v568, %v572
        %v575 = vmul.f32 %v567, %v573
        %v576 = vld [vmem:[%s359] sm:$0xff]
        %v577 = vadd.f32 %v576, %v575
        %578 = vst [vmem:[%s359] sm:$0xff] %v577
        %s579 = sand.u32 %s219, 1
        %s580 = scalar_lea.sflag [#allocation3], %s579
        %s581 = sand.u32 %s219, 1
        %s582 = smul.addr %s581, 8
        %s583 = scalar_lea.vmem [#allocation5], %s582
        // Predicated region
        $region57: #{tpu_custom_call.1} parent=47 // pred_check
          %p584 = pneg %p229
        $region58: #{tpu_custom_call.1} parent=47 // pred_check_branch
          %586 = sbr.rel (%p584) target = $region60
        $region59: #{tpu_custom_call.1} parent=47 // pred_region
          %s588 = ssub.s32 128, 128
          %589 = vsyncadd %s580, %s588
          %s590 = smul.addr %s26, 128
          %s591 = scalar_lea.hbm %s7, %s590
          %s593 = sshll.u32 %s583, 4
          %s594 = int_to_ptr.vmem [resolvable:$true] %s593
          %596 = dma.vmem_to_hbm [thread:$0]  %s594, 128, %s591, %s580
        $region60: #{tpu_custom_call.1} parent=47 // pred_fallthru
          _
      $region48: #{tpu_custom_call.1} parent=5 // pred_fallthru
        _
      %p597 = scmp.le.s32.totalorder 2, %s17
      // Predicated region
      $region61: #{tpu_custom_call.1} parent=5 // pred_check
        %p598 = pneg %p597
      $region62: #{tpu_custom_call.1} parent=5 // pred_check_branch
        %600 = sbr.rel (%p598) target = $region64
      $region63: #{tpu_custom_call.1} parent=5 // pred_region
        %s601 = ssub.s32 %s17, 2
        // Predicated region
        $region65: #{tpu_custom_call.1} parent=63 // pred_check
          %p602 = pneg %p235
        $region66: #{tpu_custom_call.1} parent=63 // pred_check_branch
          %604 = sbr.rel (%p602) target = $region68
        $region67: #{tpu_custom_call.1} parent=63 // pred_region
          %s605 = sand.u32 %s220, 1
          %s606 = scalar_lea.sflag [#allocation3], %s605
          %s607 = sand.u32 %s220, 1
          %s608 = smul.addr %s607, 8
          %s609 = scalar_lea.vmem [#allocation5], %s608
          %610 = dma.done %s606, 128
        $region68: #{tpu_custom_call.1} parent=63 // pred_fallthru
          _
      $region64: #{tpu_custom_call.1} parent=5 // pred_fallthru
        _
    $region6: #{tpu_custom_call.1} parent=1 // loop_footer
      %s21 = sadd.s32 1, %s17
    $region7: #{tpu_custom_call.1} parent=1 // loop_footer_branch
      %16 = sbr.rel target = $region3
    $region8: #{tpu_custom_call.1} parent=1 // loop_exit
      _
    %611 = vsyncpa [#allocation3], 1
    %s612 = scalar_lea.sflag [#allocation3], 1
    %613 = vsyncpa %s612, 1
    %614 = vsyncpa [#allocation4], 1
    %s615 = scalar_lea.sflag [#allocation4], 1
    %616 = vsyncpa %s615, 1

</llo_original>
